<compile_context>
chip_gen: v7x
topology: tpu7x:2x2x1
jax: 0.10.0
libtpu: 0.0.40
codegen_flags: <defaults>
</compile_context>

<pallas_src>
import jax
import jax.numpy as jnp
from jax.experimental import pallas as pl
from jax.experimental.pallas import tpu as pltpu

N_CORE_SPLIT = 2                  # per-core partial stats; harmless on single-TC chips
TM_MAX = 2048                     # max lane-tile width (multiple of 128)
VMEM_LIMIT = 32 * 1024 * 1024     # explicit budget; safe on v5e/v6e (128 MiB) and v7x (64 MiB)


# ------------------------------- Kernel 1: conv + DyT + batch stats -------------------
def _stats_kernel(alpha_ref, x_ref, w_ref, dyt_ref, sum_ref, ssq_ref):
    i = pl.program_id(1)

    # 1x1 conv == [C2, C1] @ [C1, tm] matmul on the MXU.  The contraction dim is tiny,
    # but the kernel is HBM-bound, so MXU under-utilization is irrelevant here.
    y = jnp.dot(w_ref[...], x_ref[...], preferred_element_type=jnp.float32)   # (C2, tm)

    alpha = alpha_ref[0]
    d = jnp.tanh(alpha * y) * dyt_ref[0:1, :] + dyt_ref[1:2, :]               # DyT
    z = y * d

    @pl.when(i == 0)
    def _():
        sum_ref[...] = jnp.zeros_like(sum_ref)
        ssq_ref[...] = jnp.zeros_like(ssq_ref)

    # Elementwise (VPU) accumulation into lane-wide VMEM-resident outputs; no per-step
    # cross-lane reduction.  Final reduce over (core, lane) happens in the wrapper.
    sum_ref[...] += z[None]
    ssq_ref[...] += (z * z)[None]


# ------------------------------- Kernel 2: recompute + BN affine + SiLU ---------------
def _bn_silu_kernel(alpha_ref, x_ref, w_ref, dyt_ref, scale_ref, shift_ref, o_ref):
    y = jnp.dot(w_ref[...], x_ref[...], preferred_element_type=jnp.float32)   # (C2, tm)
    alpha = alpha_ref[0]
    d = jnp.tanh(alpha * y) * dyt_ref[0:1, :] + dyt_ref[1:2, :]
    z = y * d
    h = z * scale_ref[...] + shift_ref[...]       # (C2, tm) * (C2, 1) + (C2, 1)
    o_ref[...] = h * jax.lax.logistic(h)          # SiLU


# ------------------------------- Wrapper ----------------------------------------------
@jax.jit
def dyt_conv_forward(x_nchw, conv_w, alpha, dyt_w, dyt_b, bn_gamma, bn_beta):
    eps = 1e-5
    N, C1, H, W = x_nchw.shape
    C2 = conv_w.shape[0]
    M = N * H * W

    # ---- layout glue: [C, M] with the big M dimension on lanes ----
    x_cm = jnp.transpose(x_nchw, (1, 0, 2, 3)).reshape(C1, M).astype(jnp.float32)
    w_t = conv_w.reshape(C2, C1).astype(jnp.float32)                        # [C2, C1]
    dytw_row = jnp.broadcast_to(dyt_w[None], (N, H, W)).reshape(1, M)
    dytb_row = jnp.broadcast_to(dyt_b[None], (N, H, W)).reshape(1, M)
    dyt_cm = jnp.concatenate([dytw_row, dytb_row], axis=0).astype(jnp.float32)  # [2, M]
    alpha_s = alpha.reshape(1).astype(jnp.float32)

    # ---- tiling: lane tile tm (multiple of 128); pad M so it divides evenly ----
    per_core = pl.cdiv(M, N_CORE_SPLIT)
    tm = min(TM_MAX, max(128, pl.cdiv(per_core, 128) * 128))
    chunk = N_CORE_SPLIT * tm
    Mp = pl.cdiv(M, chunk) * chunk
    tiles_per_core = Mp // chunk
    if Mp != M:
        pad = Mp - M
        # Zero-padded columns give y = 0 -> z = 0 -> contribute nothing to the batch
        # statistics, and are sliced off the output below.
        x_cm = jnp.pad(x_cm, ((0, 0), (0, pad)))
        dyt_cm = jnp.pad(dyt_cm, ((0, 0), (0, pad)))

    def data_map(c, i):
        return (0, c * tiles_per_core + i)

    def stat_map(c, i):
        return (c, 0, 0)

    # ---- pass 1: per-channel batch statistics (per-core partial accumulators) ----
    sum_acc, ssq_acc = pl.pallas_call(
        _stats_kernel,
        grid=(N_CORE_SPLIT, tiles_per_core),
        in_specs=[
            pl.BlockSpec(memory_space=pltpu.SMEM),            # alpha (scalar)
            pl.BlockSpec((C1, tm), data_map),                 # x columns
            pl.BlockSpec((C2, C1), lambda c, i: (0, 0)),      # conv weight
            pl.BlockSpec((2, tm), data_map),                  # [dyt_w; dyt_b] columns
        ],
        out_specs=(
            pl.BlockSpec((1, C2, tm), stat_map),              # per-core partial sum
            pl.BlockSpec((1, C2, tm), stat_map),              # per-core partial sumsq
        ),
        out_shape=(
            jax.ShapeDtypeStruct((N_CORE_SPLIT, C2, tm), jnp.float32),
            jax.ShapeDtypeStruct((N_CORE_SPLIT, C2, tm), jnp.float32),
        ),
        compiler_params=pltpu.CompilerParams(
            dimension_semantics=("parallel", "arbitrary"),
            vmem_limit_bytes=VMEM_LIMIT),
    )(alpha_s, x_cm, w_t, dyt_cm)

    # ---- tiny glue: BN scale/shift from training-mode batch stats (biased variance) ----
    csum = jnp.sum(sum_acc, axis=(0, 2))                      # (C2,)
    cssq = jnp.sum(ssq_acc, axis=(0, 2))                      # (C2,)
    mean = csum / M
    var = cssq / M - mean * mean
    inv = bn_gamma.astype(jnp.float32) / jnp.sqrt(var + eps)  # (C2,)
    scale = inv.reshape(C2, 1)
    shift = (bn_beta.astype(jnp.float32) - mean * inv).reshape(C2, 1)

    # ---- pass 2: recompute z, apply BN affine + SiLU, lane-dense output ----
    out_cm = pl.pallas_call(
        _bn_silu_kernel,
        grid=(Mp // tm,),
        in_specs=[
            pl.BlockSpec(memory_space=pltpu.SMEM),            # alpha
            pl.BlockSpec((C1, tm), lambda i: (0, i)),         # x columns (re-read)
            pl.BlockSpec((C2, C1), lambda i: (0, 0)),         # conv weight
            pl.BlockSpec((2, tm), lambda i: (0, i)),          # DyT rows
            pl.BlockSpec((C2, 1), lambda i: (0, 0)),          # BN scale (per channel)
            pl.BlockSpec((C2, 1), lambda i: (0, 0)),          # BN shift (per channel)
        ],
        out_specs=pl.BlockSpec((C2, tm), lambda i: (0, i)),
        out_shape=jax.ShapeDtypeStruct((C2, Mp), jnp.float32),
        compiler_params=pltpu.CompilerParams(
            dimension_semantics=("parallel",),
            vmem_limit_bytes=VMEM_LIMIT),
    )(alpha_s, x_cm, w_t, dyt_cm, scale, shift)

    # ---- layout glue back to NCHW ----
    out = out_cm[:, :M].reshape(C2, N, H, W)
    return jnp.transpose(out, (1, 0, 2, 3))


# ------------------------------- Reference --------------------------------------------
def reference_forward(x_nchw, conv_w, alpha, dyt_w, dyt_b, bn_gamma, bn_beta, eps=1e-5):
    N, C1, H, W = x_nchw.shape
    C2 = conv_w.shape[0]
    # 1x1 conv, NCHW
    y = jnp.einsum("nchw,oc->nohw", x_nchw, conv_w.reshape(C2, C1))
    # DyT, channels_last broadcasting against trailing dims [H, W]
    d = jnp.tanh(alpha.reshape(()) * y) * dyt_w + dyt_b
    z = y * d
    # BN training-mode (batch stats over N, H, W; biased variance)
    mean = jnp.mean(z, axis=(0, 2, 3), keepdims=True)
    var = jnp.mean((z - mean) ** 2, axis=(0, 2, 3), keepdims=True)
    h = (z - mean) / jnp.sqrt(var + eps) * bn_gamma[None, :, None, None] \
        + bn_beta[None, :, None, None]
    return h * jax.nn.sigmoid(h)


# --------------------------------- Main ------------------------------------------------
if __name__ == "__main__":
    N, C1, C2, H, W = 2, 4, 8, 16, 16   # k=1, s=1 -> same spatial output

    key = jax.random.PRNGKey(0)
    kx, kw = jax.random.split(key)

    x = jax.random.normal(kx, (N, C1, H, W), dtype=jnp.float32)

    # Parameters, deterministic per the module's __init__:
    # Conv2d(c1, c2, 1, bias=False): weight [C2, C1, 1, 1], kaiming-uniform-like
    bound = 1.0 / (C1 ** 0.5)
    conv_w = jax.random.uniform(kw, (C2, C1, 1, 1), jnp.float32, -bound, bound)
    # DynamicTanh(shape=[H, W]): alpha=0.5, weight=ones, bias=zeros
    alpha = jnp.array([0.5], dtype=jnp.float32)
    dyt_w = jnp.ones((H, W), dtype=jnp.float32)
    dyt_b = jnp.zeros((H, W), dtype=jnp.float32)
    # BatchNorm2d(c2): gamma=ones, beta=zeros
    bn_gamma = jnp.ones((C2,), dtype=jnp.float32)
    bn_beta = jnp.zeros((C2,), dtype=jnp.float32)

    out = dyt_conv_forward(x, conv_w, alpha, dyt_w, dyt_b, bn_gamma, bn_beta)
    out = jax.block_until_ready(out)

    ref = reference_forward(x, conv_w, alpha, dyt_w, dyt_b, bn_gamma, bn_beta)
    assert out.shape == (N, C2, H, W)
    assert jnp.allclose(out, ref, atol=1e-4, rtol=1e-4), "mismatch vs reference"

    print("KERNEL_OK")
</pallas_src>

<mosaic_0001>
module attributes {stable_mosaic.version = 11 : i64} {
  func.func @_stats_kernel(%arg0: i32, %arg1: i32, %arg2: memref<1xf32, #tpu.memory_space<smem>>, %arg3: memref<4x256xf32, #tpu.memory_space<vmem>>, %arg4: memref<8x4xf32, #tpu.memory_space<vmem>>, %arg5: memref<2x256xf32, #tpu.memory_space<vmem>>, %arg6: memref<1x8x256xf32, #tpu.memory_space<vmem>>, %arg7: memref<1x8x256xf32, #tpu.memory_space<vmem>>) attributes {dimension_semantics = [#tpu.dimension_semantics<parallel>, #tpu.dimension_semantics<arbitrary>], iteration_bounds = array<i64: 2, 1>, scalar_prefetch = 0 : i64, scratch_operands = 0 : i64, tpu.core_type = #tpu.core_type<tc>, window_params = [{transform_indices = @transform_0, window_bounds = array<i64: 1>}, {transform_indices = @transform_1, window_bounds = array<i64: 4, 256>}, {pipeline_mode = #tpu.pipeline_mode<synchronous>, transform_indices = @transform_2, window_bounds = array<i64: 8, 4>}, {transform_indices = @transform_3, window_bounds = array<i64: 2, 256>}, {transform_indices = @transform_4, window_bounds = array<i64: 1, 8, 256>}, {transform_indices = @transform_5, window_bounds = array<i64: 1, 8, 256>}]} {
    %c0 = arith.constant 0 : index
    %c0_0 = arith.constant 0 : index
    %0 = vector.load %arg4[%c0, %c0_0] : memref<8x4xf32, #tpu.memory_space<vmem>>, vector<8x4xf32>
    %c0_1 = arith.constant 0 : index
    %c0_2 = arith.constant 0 : index
    %1 = vector.load %arg3[%c0_1, %c0_2] : memref<4x256xf32, #tpu.memory_space<vmem>>, vector<4x256xf32>
    %cst = arith.constant dense<0.000000e+00> : vector<8x256xf32>
    %2 = tpu.matmul %0, %1, %cst {dimension_numbers = #tpu.dot_dimension_numbers<[1], [0], [0], [1], [0, 0, 1, 1], [], []>} : vector<8x4xf32>, vector<4x256xf32>, vector<8x256xf32> -> vector<8x256xf32>
    %c0_3 = arith.constant 0 : index
    %3 = memref.load %arg2[%c0_3] : memref<1xf32, #tpu.memory_space<smem>>
    %4 = vector.broadcast %3 : f32 to vector<8x256xf32>
    %5 = arith.mulf %4, %2 : vector<8x256xf32>
    %6 = math.tanh %5 : vector<8x256xf32>
    %c0_4 = arith.constant 0 : index
    %c0_5 = arith.constant 0 : index
    %7 = vector.load %arg5[%c0_4, %c0_5] : memref<2x256xf32, #tpu.memory_space<vmem>>, vector<1x256xf32>
    %8 = vector.broadcast %7 : vector<1x256xf32> to vector<8x256xf32>
    %9 = arith.mulf %6, %8 : vector<8x256xf32>
    %c1 = arith.constant 1 : index
    %c0_6 = arith.constant 0 : index
    %10 = vector.load %arg5[%c1, %c0_6] : memref<2x256xf32, #tpu.memory_space<vmem>>, vector<1x256xf32>
    %11 = vector.broadcast %10 : vector<1x256xf32> to vector<8x256xf32>
    %12 = arith.addf %9, %11 : vector<8x256xf32>
    %13 = arith.mulf %2, %12 : vector<8x256xf32>
    %c0_i32 = arith.constant 0 : i32
    %14 = arith.cmpi eq, %arg1, %c0_i32 : i32
    %15 = arith.extui %14 : i1 to i32
    %c0_i32_7 = arith.constant 0 : i32
    %16 = arith.cmpi ne, %15, %c0_i32_7 : i32
    scf.if %16 {
      %cst_20 = arith.constant 0.000000e+00 : f32
      %26 = vector.broadcast %cst_20 : f32 to vector<1x8x256xf32>
      %c0_21 = arith.constant 0 : index
      %c0_22 = arith.constant 0 : index
      %c0_23 = arith.constant 0 : index
      %27 = vector.load %arg6[%c0_21, %c0_22, %c0_23] : memref<1x8x256xf32, #tpu.memory_space<vmem>>, vector<1x8x256xf32>
      tpu.vector_store %arg6[%c0_21, %c0_22, %c0_23], %26 {strides = array<i32>} : memref<1x8x256xf32, #tpu.memory_space<vmem>>, vector<1x8x256xf32>,
      %cst_24 = arith.constant 0.000000e+00 : f32
      %28 = vector.broadcast %cst_24 : f32 to vector<1x8x256xf32>
      %c0_25 = arith.constant 0 : index
      %c0_26 = arith.constant 0 : index
      %c0_27 = arith.constant 0 : index
      %29 = vector.load %arg7[%c0_25, %c0_26, %c0_27] : memref<1x8x256xf32, #tpu.memory_space<vmem>>, vector<1x8x256xf32>
      tpu.vector_store %arg7[%c0_25, %c0_26, %c0_27], %28 {strides = array<i32>} : memref<1x8x256xf32, #tpu.memory_space<vmem>>, vector<1x8x256xf32>,
    } else {
    }
    %c0_8 = arith.constant 0 : index
    %c0_9 = arith.constant 0 : index
    %c0_10 = arith.constant 0 : index
    %17 = vector.load %arg6[%c0_8, %c0_9, %c0_10] : memref<1x8x256xf32, #tpu.memory_space<vmem>>, vector<1x8x256xf32>
    %18 = vector.shape_cast %13 : vector<8x256xf32> to vector<1x8x256xf32>
    %19 = arith.addf %17, %18 : vector<1x8x256xf32>
    %c0_11 = arith.constant 0 : index
    %c0_12 = arith.constant 0 : index
    %c0_13 = arith.constant 0 : index
    %20 = vector.load %arg6[%c0_11, %c0_12, %c0_13] : memref<1x8x256xf32, #tpu.memory_space<vmem>>, vector<1x8x256xf32>
    tpu.vector_store %arg6[%c0_11, %c0_12, %c0_13], %19 {strides = array<i32>} : memref<1x8x256xf32, #tpu.memory_space<vmem>>, vector<1x8x256xf32>,
    %c0_14 = arith.constant 0 : index
    %c0_15 = arith.constant 0 : index
    %c0_16 = arith.constant 0 : index
    %21 = vector.load %arg7[%c0_14, %c0_15, %c0_16] : memref<1x8x256xf32, #tpu.memory_space<vmem>>, vector<1x8x256xf32>
    %22 = arith.mulf %13, %13 : vector<8x256xf32>
    %23 = vector.shape_cast %22 : vector<8x256xf32> to vector<1x8x256xf32>
    %24 = arith.addf %21, %23 : vector<1x8x256xf32>
    %c0_17 = arith.constant 0 : index
    %c0_18 = arith.constant 0 : index
    %c0_19 = arith.constant 0 : index
    %25 = vector.load %arg7[%c0_17, %c0_18, %c0_19] : memref<1x8x256xf32, #tpu.memory_space<vmem>>, vector<1x8x256xf32>
    tpu.vector_store %arg7[%c0_17, %c0_18, %c0_19], %24 {strides = array<i32>} : memref<1x8x256xf32, #tpu.memory_space<vmem>>, vector<1x8x256xf32>,
    return
  }
  func.func @transform_0(%arg0: i32, %arg1: i32) -> i32 {
    %c0_i32 = arith.constant 0 : i32
    %c0_i32_0 = arith.constant 0 : i32
    return %c0_i32 : i32
  }
  func.func @transform_1(%arg0: i32, %arg1: i32) -> (i32, i32) {
    %c1_i32 = arith.constant 1 : i32
    %0 = arith.muli %arg0, %c1_i32 : i32
    %1 = arith.addi %0, %arg1 : i32
    %c0_i32 = arith.constant 0 : i32
    %c0_i32_0 = arith.constant 0 : i32
    return %c0_i32, %1 : i32, i32
  }
  func.func @transform_2(%arg0: i32, %arg1: i32) -> (i32, i32) {
    %c0_i32 = arith.constant 0 : i32
    %c0_i32_0 = arith.constant 0 : i32
    %c0_i32_1 = arith.constant 0 : i32
    return %c0_i32, %c0_i32_0 : i32, i32
  }
  func.func @transform_3(%arg0: i32, %arg1: i32) -> (i32, i32) {
    %c1_i32 = arith.constant 1 : i32
    %0 = arith.muli %arg0, %c1_i32 : i32
    %1 = arith.addi %0, %arg1 : i32
    %c0_i32 = arith.constant 0 : i32
    %c0_i32_0 = arith.constant 0 : i32
    return %c0_i32, %1 : i32, i32
  }
  func.func @transform_4(%arg0: i32, %arg1: i32) -> (i32, i32, i32) {
    %c0_i32 = arith.constant 0 : i32
    %c0_i32_0 = arith.constant 0 : i32
    %c0_i32_1 = arith.constant 0 : i32
    return %arg0, %c0_i32, %c0_i32_0 : i32, i32, i32
  }
  func.func @transform_5(%arg0: i32, %arg1: i32) -> (i32, i32, i32) {
    %c0_i32 = arith.constant 0 : i32
    %c0_i32_0 = arith.constant 0 : i32
    %c0_i32_1 = arith.constant 0 : i32
    return %arg0, %c0_i32, %c0_i32_0 : i32, i32, i32
  }
}

module attributes {stable_mosaic.version = 11 : i64} {
  func.func @_bn_silu_kernel(%arg0: i32, %arg1: memref<1xf32, #tpu.memory_space<smem>>, %arg2: memref<4x256xf32, #tpu.memory_space<vmem>>, %arg3: memref<8x4xf32, #tpu.memory_space<vmem>>, %arg4: memref<2x256xf32, #tpu.memory_space<vmem>>, %arg5: memref<8x1xf32, #tpu.memory_space<vmem>>, %arg6: memref<8x1xf32, #tpu.memory_space<vmem>>, %arg7: memref<8x256xf32, #tpu.memory_space<vmem>>) attributes {dimension_semantics = [#tpu.dimension_semantics<parallel>], iteration_bounds = array<i64: 2>, scalar_prefetch = 0 : i64, scratch_operands = 0 : i64, tpu.core_type = #tpu.core_type<tc>, window_params = [{transform_indices = @transform_0, window_bounds = array<i64: 1>}, {transform_indices = @transform_1, window_bounds = array<i64: 4, 256>}, {pipeline_mode = #tpu.pipeline_mode<synchronous>, transform_indices = @transform_2, window_bounds = array<i64: 8, 4>}, {transform_indices = @transform_3, window_bounds = array<i64: 2, 256>}, {pipeline_mode = #tpu.pipeline_mode<synchronous>, transform_indices = @transform_4, window_bounds = array<i64: 8, 1>}, {pipeline_mode = #tpu.pipeline_mode<synchronous>, transform_indices = @transform_5, window_bounds = array<i64: 8, 1>}, {transform_indices = @transform_6, window_bounds = array<i64: 8, 256>}]} {
    %c0 = arith.constant 0 : index
    %c0_0 = arith.constant 0 : index
    %0 = vector.load %arg3[%c0, %c0_0] : memref<8x4xf32, #tpu.memory_space<vmem>>, vector<8x4xf32>
    %c0_1 = arith.constant 0 : index
    %c0_2 = arith.constant 0 : index
    %1 = vector.load %arg2[%c0_1, %c0_2] : memref<4x256xf32, #tpu.memory_space<vmem>>, vector<4x256xf32>
    %cst = arith.constant dense<0.000000e+00> : vector<8x256xf32>
    %2 = tpu.matmul %0, %1, %cst {dimension_numbers = #tpu.dot_dimension_numbers<[1], [0], [0], [1], [0, 0, 1, 1], [], []>} : vector<8x4xf32>, vector<4x256xf32>, vector<8x256xf32> -> vector<8x256xf32>
    %c0_3 = arith.constant 0 : index
    %3 = memref.load %arg1[%c0_3] : memref<1xf32, #tpu.memory_space<smem>>
    %4 = vector.broadcast %3 : f32 to vector<8x256xf32>
    %5 = arith.mulf %4, %2 : vector<8x256xf32>
    %6 = math.tanh %5 : vector<8x256xf32>
    %c0_4 = arith.constant 0 : index
    %c0_5 = arith.constant 0 : index
    %7 = vector.load %arg4[%c0_4, %c0_5] : memref<2x256xf32, #tpu.memory_space<vmem>>, vector<1x256xf32>
    %8 = vector.broadcast %7 : vector<1x256xf32> to vector<8x256xf32>
    %9 = arith.mulf %6, %8 : vector<8x256xf32>
    %c1 = arith.constant 1 : index
    %c0_6 = arith.constant 0 : index
    %10 = vector.load %arg4[%c1, %c0_6] : memref<2x256xf32, #tpu.memory_space<vmem>>, vector<1x256xf32>
    %11 = vector.broadcast %10 : vector<1x256xf32> to vector<8x256xf32>
    %12 = arith.addf %9, %11 : vector<8x256xf32>
    %13 = arith.mulf %2, %12 : vector<8x256xf32>
    %c0_7 = arith.constant 0 : index
    %c0_8 = arith.constant 0 : index
    %14 = vector.load %arg5[%c0_7, %c0_8] : memref<8x1xf32, #tpu.memory_space<vmem>>, vector<8x1xf32>
    %15 = vector.broadcast %14 : vector<8x1xf32> to vector<8x256xf32>
    %16 = arith.mulf %13, %15 : vector<8x256xf32>
    %c0_9 = arith.constant 0 : index
    %c0_10 = arith.constant 0 : index
    %17 = vector.load %arg6[%c0_9, %c0_10] : memref<8x1xf32, #tpu.memory_space<vmem>>, vector<8x1xf32>
    %18 = vector.broadcast %17 : vector<8x1xf32> to vector<8x256xf32>
    %19 = arith.addf %16, %18 : vector<8x256xf32>
    %20 = arith.negf %19 : vector<8x256xf32>
    %21 = math.exp %20 : vector<8x256xf32>
    %cst_11 = arith.constant 1.000000e+00 : f32
    %22 = vector.broadcast %cst_11 : f32 to vector<8x256xf32>
    %23 = arith.addf %22, %21 : vector<8x256xf32>
    %24 = arith.divf %22, %23 : vector<8x256xf32>
    %25 = arith.mulf %19, %24 : vector<8x256xf32>
    %c0_12 = arith.constant 0 : index
    %c0_13 = arith.constant 0 : index
    %26 = vector.load %arg7[%c0_12, %c0_13] : memref<8x256xf32, #tpu.memory_space<vmem>>, vector<8x256xf32>
    tpu.vector_store %arg7[%c0_12, %c0_13], %25 {strides = array<i32>} : memref<8x256xf32, #tpu.memory_space<vmem>>, vector<8x256xf32>,
    return
  }
  func.func @transform_0(%arg0: i32) -> i32 {
    %c0_i32 = arith.constant 0 : i32
    %c0_i32_0 = arith.constant 0 : i32
    return %c0_i32 : i32
  }
  func.func @transform_1(%arg0: i32) -> (i32, i32) {
    %c0_i32 = arith.constant 0 : i32
    %c0_i32_0 = arith.constant 0 : i32
    return %c0_i32, %arg0 : i32, i32
  }
  func.func @transform_2(%arg0: i32) -> (i32, i32) {
    %c0_i32 = arith.constant 0 : i32
    %c0_i32_0 = arith.constant 0 : i32
    %c0_i32_1 = arith.constant 0 : i32
    return %c0_i32, %c0_i32_0 : i32, i32
  }
  func.func @transform_3(%arg0: i32) -> (i32, i32) {
    %c0_i32 = arith.constant 0 : i32
    %c0_i32_0 = arith.constant 0 : i32
    return %c0_i32, %arg0 : i32, i32
  }
  func.func @transform_4(%arg0: i32) -> (i32, i32) {
    %c0_i32 = arith.constant 0 : i32
    %c0_i32_0 = arith.constant 0 : i32
    %c0_i32_1 = arith.constant 0 : i32
    return %c0_i32, %c0_i32_0 : i32, i32
  }
  func.func @transform_5(%arg0: i32) -> (i32, i32) {
    %c0_i32 = arith.constant 0 : i32
    %c0_i32_0 = arith.constant 0 : i32
    %c0_i32_1 = arith.constant 0 : i32
    return %c0_i32, %c0_i32_0 : i32, i32
  }
  func.func @transform_6(%arg0: i32) -> (i32, i32) {
    %c0_i32 = arith.constant 0 : i32
    %c0_i32_0 = arith.constant 0 : i32
    return %c0_i32, %arg0 : i32, i32
  }
}

</mosaic_0001>

<llo_original>
// kernel: dyt_conv_forward.2
$region0: #{dyt_conv_forward.2}
  #allocation0 [shape = 'u32[]', space=smem, size = 0x4, offset = 0x4, fixed_abs, tag = 'smem constant byte address 0x4 - core index']
  #allocation1 [shape = 'u32[144,128]{1,0:T(1,128)}', space=vmem, size = 0x12000, scoped, tag = 'internal scratch']
  #allocation2 [shape = 'f32[1]{0:T(128)S(6)}', space=smem, size = 0x200, scoped, tag = 'scoped memory for dyt_conv_forward.2']
  %s0 = inlined_call_operand.<no memory space> [shape: f32[1], index: 0, kind: input, shape index: {}]
  %s1 = inlined_call_operand.vmem [shape: f32[4,512], index: 1, kind: input, shape index: {}]
  %s2 = inlined_call_operand.vmem [shape: f32[8,4], index: 2, kind: input, shape index: {}]
  %s3 = inlined_call_operand.vmem [shape: f32[2,512], index: 3, kind: input, shape index: {}]
  %s4 = inlined_call_operand.vmem [shape: f32[2,8,256], index: 4, kind: output, shape index: {0}]
  %s5 = inlined_call_operand.vmem [shape: f32[2,8,256], index: 5, kind: output, shape index: {1}]
  %6 = xla_tuple %s4, %s5
  %s7 = sld [smem:[#allocation0]]
  $region61: #{dyt_conv_forward.2} parent=0
    _
  %s9 = ssub.s32 1, %s7
  %s10 = scalar_select 0, %s9, %s7
  %11 = sst [smem:[#allocation2]] %s0
  loop: start=0, step=1, limit=4
  $region2: #{dyt_conv_forward.2} parent=0 // loop_pre_header
    _
  $region3: #{dyt_conv_forward.2} parent=0 // loop_header
    %s13 = sphi 0, %s17
    %p14 = scmp.ge.s32.totalorder %s13, 4
    %s20 = sphi 0, %s32
    %s21 = sphi 0, %s28
    %s22 = sphi 0, %s20
    %s23 = sphi 0, %s21
    %s24 = sphi 0, %s22
    %s25 = sphi 0, %s23
    %s33 = sphi 0, %s33
    %s35 = sphi 0, %s33
    %s36 = sphi 0, %s35
    %s50 = sphi 0, %s36
    %s58 = sphi 0, %s60
    %s61 = sphi 0, %s58
    %s62 = sphi 0, %s61
    %s78 = sphi 0, %s62
    %s82 = sphi 0, %s82
    %s84 = sphi 0, %s82
    %s85 = sphi 0, %s84
    %s99 = sphi 0, %s85
    %s107 = sphi 0, %s109
    %s110 = sphi 0, %s107
    %s111 = sphi 0, %s110
    %s127 = sphi 0, %s111
    %s133 = sphi 0, %s135
    %s136 = sphi 0, %s133
    %s137 = sphi 0, %s136
    %s153 = sphi 0, %s137
    %s159 = sphi 0, %s161
    %s162 = sphi 0, %s159
    %s163 = sphi 0, %s162
    %s179 = sphi 0, %s163
  $region4: #{dyt_conv_forward.2} parent=0 // loop_header_branch
    %16 = sbr.rel (%p14) target = $region8
  $region5: #{dyt_conv_forward.2} parent=0 // loop_body
    %s18 = ssub.s32 %s13, 1
    %s19 = ssub.s32 %s13, 2
    %s26 = sadd.s32 1, %s21
    %p27 = scmp.ge.s32.totalorder %s26, 1
    %s28 = scalar_select %p27, 0, %s26
    %s29 = sadd.s32 1, %s20
    %s30 = scalar_select %p27, %s29, %s20
    %p31 = scmp.ge.s32.totalorder %s30, 2
    %s32 = scalar_select %p31, 0, %s30
    %s34 = sadd.s32 %s33, 1
    %p37 = scmp.eq.s32.totalorder %s13, 1
    %p38 = scmp.ne.s32.totalorder %s33, %s35
    %p39 = scmp.eq.s32.totalorder %s13, 0
    %p40 = por %p38, %p39
    %p41 = scmp.ne.s32.totalorder %s33, %s35
    %p42 = scmp.eq.s32.totalorder %s18, 1
    %p43 = por %p41, %p42
    %p44 = scmp.ne.s32.totalorder %s35, %s36
    %p45 = scmp.eq.s32.totalorder %s18, 0
    %p46 = por %p44, %p45
    %p47 = scmp.ne.s32.totalorder %s35, %s36
    %p48 = scmp.eq.s32.totalorder %s19, 1
    %p49 = por %p47, %p48
    %p51 = scmp.ne.s32.totalorder %s36, %s50
    %p52 = scmp.eq.s32.totalorder %s19, 0
    %p53 = por %p51, %p52
    %s54 = sadd.s32 %s20, %s21
    %s55 = sadd.s32 %s32, %s28
    %s56 = ssub.s32 %s54, %s55
    %p57 = scmp.eq.s32.totalorder %s56, 0
    %s59 = sadd.s32 %s58, 1
    %s60 = scalar_select %p57, %s58, %s59
    %p63 = pneg %p57
    %p64 = scmp.eq.s32.totalorder %s13, 1
    %p65 = por %p63, %p64
    %p66 = scmp.ne.s32.totalorder %s58, %s61
    %p67 = scmp.eq.s32.totalorder %s13, 0
    %p68 = por %p66, %p67
    %p69 = scmp.ne.s32.totalorder %s58, %s61
    %p70 = scmp.eq.s32.totalorder %s18, 1
    %p71 = por %p69, %p70
    %p72 = scmp.ne.s32.totalorder %s61, %s62
    %p73 = scmp.eq.s32.totalorder %s18, 0
    %p74 = por %p72, %p73
    %p75 = scmp.ne.s32.totalorder %s61, %s62
    %p76 = scmp.eq.s32.totalorder %s19, 1
    %p77 = por %p75, %p76
    %p79 = scmp.ne.s32.totalorder %s62, %s78
    %p80 = scmp.eq.s32.totalorder %s19, 0
    %p81 = por %p79, %p80
    %s83 = sadd.s32 %s82, 1
    %p86 = scmp.eq.s32.totalorder %s13, 1
    %p87 = scmp.ne.s32.totalorder %s82, %s84
    %p88 = scmp.eq.s32.totalorder %s13, 0
    %p89 = por %p87, %p88
    %p90 = scmp.ne.s32.totalorder %s82, %s84
    %p91 = scmp.eq.s32.totalorder %s18, 1
    %p92 = por %p90, %p91
    %p93 = scmp.ne.s32.totalorder %s84, %s85
    %p94 = scmp.eq.s32.totalorder %s18, 0
    %p95 = por %p93, %p94
    %p96 = scmp.ne.s32.totalorder %s84, %s85
    %p97 = scmp.eq.s32.totalorder %s19, 1
    %p98 = por %p96, %p97
    %p100 = scmp.ne.s32.totalorder %s85, %s99
    %p101 = scmp.eq.s32.totalorder %s19, 0
    %p102 = por %p100, %p101
    %s103 = sadd.s32 %s20, %s21
    %s104 = sadd.s32 %s32, %s28
    %s105 = ssub.s32 %s103, %s104
    %p106 = scmp.eq.s32.totalorder %s105, 0
    %s108 = sadd.s32 %s107, 1
    %s109 = scalar_select %p106, %s107, %s108
    %p112 = pneg %p106
    %p113 = scmp.eq.s32.totalorder %s13, 1
    %p114 = por %p112, %p113
    %p115 = scmp.ne.s32.totalorder %s107, %s110
    %p116 = scmp.eq.s32.totalorder %s13, 0
    %p117 = por %p115, %p116
    %p118 = scmp.ne.s32.totalorder %s107, %s110
    %p119 = scmp.eq.s32.totalorder %s18, 1
    %p120 = por %p118, %p119
    %p121 = scmp.ne.s32.totalorder %s110, %s111
    %p122 = scmp.eq.s32.totalorder %s18, 0
    %p123 = por %p121, %p122
    %p124 = scmp.ne.s32.totalorder %s110, %s111
    %p125 = scmp.eq.s32.totalorder %s19, 1
    %p126 = por %p124, %p125
    %p128 = scmp.ne.s32.totalorder %s111, %s127
    %p129 = scmp.eq.s32.totalorder %s19, 0
    %p130 = por %p128, %p129
    %s131 = ssub.s32 %s20, %s32
    %p132 = scmp.eq.s32.totalorder %s131, 0
    %s134 = sadd.s32 %s133, 1
    %s135 = scalar_select %p132, %s133, %s134
    %p138 = pneg %p132
    %p139 = scmp.eq.s32.totalorder %s13, 1
    %p140 = por %p138, %p139
    %p141 = scmp.ne.s32.totalorder %s133, %s136
    %p142 = scmp.eq.s32.totalorder %s13, 0
    %p143 = por %p141, %p142
    %p144 = scmp.ne.s32.totalorder %s133, %s136
    %p145 = scmp.eq.s32.totalorder %s18, 1
    %p146 = por %p144, %p145
    %p147 = scmp.ne.s32.totalorder %s136, %s137
    %p148 = scmp.eq.s32.totalorder %s18, 0
    %p149 = por %p147, %p148
    %p150 = scmp.ne.s32.totalorder %s136, %s137
    %p151 = scmp.eq.s32.totalorder %s19, 1
    %p152 = por %p150, %p151
    %p154 = scmp.ne.s32.totalorder %s137, %s153
    %p155 = scmp.eq.s32.totalorder %s19, 0
    %p156 = por %p154, %p155
    %s157 = ssub.s32 %s20, %s32
    %p158 = scmp.eq.s32.totalorder %s157, 0
    %s160 = sadd.s32 %s159, 1
    %s161 = scalar_select %p158, %s159, %s160
    %p164 = pneg %p158
    %p165 = scmp.eq.s32.totalorder %s13, 1
    %p166 = por %p164, %p165
    %p167 = scmp.ne.s32.totalorder %s159, %s162
    %p168 = scmp.eq.s32.totalorder %s13, 0
    %p169 = por %p167, %p168
    %p170 = scmp.ne.s32.totalorder %s159, %s162
    %p171 = scmp.eq.s32.totalorder %s18, 1
    %p172 = por %p170, %p171
    %p173 = scmp.ne.s32.totalorder %s162, %s163
    %p174 = scmp.eq.s32.totalorder %s18, 0
    %p175 = por %p173, %p174
    %p176 = scmp.ne.s32.totalorder %s162, %s163
    %p177 = scmp.eq.s32.totalorder %s19, 1
    %p178 = por %p176, %p177
    %p180 = scmp.ne.s32.totalorder %s163, %s179
    %p181 = scmp.eq.s32.totalorder %s19, 0
    %p182 = por %p180, %p181
    %p183 = scmp.le.s32.totalorder 1, %s13
    %p184 = scmp.lt.s32.totalorder %s13, 3
    %p185 = pnand %p183, %p184
    %p186 = pneg %p185
    // Predicated region
    $region9: #{dyt_conv_forward.2} parent=5 // pred_check
      _
    $region10: #{dyt_conv_forward.2} parent=5 // pred_check_branch
      %188 = sbr.rel (%p185) target = $region12
    $region11: #{dyt_conv_forward.2} parent=5 // pred_region
      %s189 = ssub.s32 %s13, 1
      // Predicated region
      $region13: #{dyt_conv_forward.2} parent=11 // pred_check
        %p190 = pneg %p46
      $region14: #{dyt_conv_forward.2} parent=11 // pred_check_branch
        %192 = sbr.rel (%p190) target = $region16
      $region15: #{dyt_conv_forward.2} parent=11 // pred_region
        _
      $region16: #{dyt_conv_forward.2} parent=11 // pred_fallthru
        _
      // Predicated region
      $region17: #{dyt_conv_forward.2} parent=11 // pred_check
        %p193 = pneg %p95
      $region18: #{dyt_conv_forward.2} parent=11 // pred_check_branch
        %195 = sbr.rel (%p193) target = $region20
      $region19: #{dyt_conv_forward.2} parent=11 // pred_region
        _
      $region20: #{dyt_conv_forward.2} parent=11 // pred_fallthru
        _
    $region12: #{dyt_conv_forward.2} parent=5 // pred_fallthru
      _
    %p196 = scmp.lt.s32.totalorder %s13, 2
    // Predicated region
    $region21: #{dyt_conv_forward.2} parent=5 // pred_check
      %p197 = pneg %p196
    $region22: #{dyt_conv_forward.2} parent=5 // pred_check_branch
      %199 = sbr.rel (%p197) target = $region24
    $region23: #{dyt_conv_forward.2} parent=5 // pred_region
      // Predicated region
      $region25: #{dyt_conv_forward.2} parent=23 // pred_check
        %p200 = pneg %p68
      $region26: #{dyt_conv_forward.2} parent=23 // pred_check_branch
        %202 = sbr.rel (%p200) target = $region28
      $region27: #{dyt_conv_forward.2} parent=23 // pred_region
        %s203 = sadd.s32 %s20, %s21
        %s204 = smul.u32 2, %s203
        %p205 = scmp.lt.s32.totalorder %s204, 3
        %s206 = scalar_select %p205, %s204, 3
        %s207 = smul.addr %s206, 4
        %s208 = scalar_lea.vmem %s1, %s207
        %s209 = sadd.s32 %s20, %s21
        %s210 = smul.u32 2, %s209
      $region28: #{dyt_conv_forward.2} parent=23 // pred_fallthru
        _
      // Predicated region
      $region29: #{dyt_conv_forward.2} parent=23 // pred_check
        %p211 = pneg %p117
      $region30: #{dyt_conv_forward.2} parent=23 // pred_check_branch
        %213 = sbr.rel (%p211) target = $region32
      $region31: #{dyt_conv_forward.2} parent=23 // pred_region
        %s214 = sadd.s32 %s20, %s21
        %s215 = smul.u32 2, %s214
        %p216 = scmp.lt.s32.totalorder %s215, 3
        %s217 = scalar_select %p216, %s215, 3
        %s218 = smul.addr %s217, 2
        %s219 = scalar_lea.vmem %s3, %s218
        %s220 = sadd.s32 %s20, %s21
        %s221 = smul.u32 2, %s220
      $region32: #{dyt_conv_forward.2} parent=23 // pred_fallthru
        _
    $region24: #{dyt_conv_forward.2} parent=5 // pred_fallthru
      _
    %p222 = scmp.le.s32.totalorder 1, %s13
    %p223 = scmp.lt.s32.totalorder %s13, 3
    %p224 = pnand %p222, %p223
    %p225 = pneg %p224
    // Predicated region
    $region33: #{dyt_conv_forward.2} parent=5 // pred_check
      _
    $region34: #{dyt_conv_forward.2} parent=5 // pred_check_branch
      %227 = sbr.rel (%p224) target = $region36
    $region35: #{dyt_conv_forward.2} parent=5 // pred_region
      %s228 = ssub.s32 %s13, 1
      %p229 = pneg %p46
      %p230 = pneg %p43
      %s231 = sadd.s32 %s22, %s23
      %s232 = smul.u32 2, %s231
      %p233 = scmp.lt.s32.totalorder %s232, 3
      %s234 = scalar_select %p233, %s232, 3
      %s235 = smul.addr %s234, 4
      %s236 = scalar_lea.vmem %s1, %s235
      %p237 = pneg %p74
      %p238 = pneg %p71
      %p239 = pneg %p95
      %p240 = pneg %p92
      %s241 = sadd.s32 %s22, %s23
      %s242 = smul.u32 2, %s241
      %p243 = scmp.lt.s32.totalorder %s242, 3
      %s244 = scalar_select %p243, %s242, 3
      %s245 = smul.addr %s244, 2
      %s246 = scalar_lea.vmem %s3, %s245
      %p247 = pneg %p123
      %p248 = pneg %p120
      %p249 = pneg %p149
      %p250 = pneg %p146
      %p251 = scmp.lt.s32.totalorder %s22, 1
      %s252 = scalar_select %p251, %s22, 1
      %s253 = smul.addr %s252, 2
      %s254 = smul.addr %s253, 8
      %s255 = scalar_lea.vmem %s4, %s254
      %p256 = pneg %p175
      %p257 = pneg %p172
      %p258 = scmp.lt.s32.totalorder %s22, 1
      %s259 = scalar_select %p258, %s22, 1
      %s260 = smul.addr %s259, 2
      %s261 = smul.addr %s260, 8
      %s262 = scalar_lea.vmem %s5, %s261
      %s263 = sadd.s32 %s22, %s23
      %s264 = smul.u32 2, %s263
      %p265 = scmp.lt.s32.totalorder %s264, 3
      %s266 = scalar_select %p265, %s264, 3
      %s267 = smul.addr %s266, 4
      %s268 = scalar_lea.vmem %s1, %s267
      %s269 = sadd.s32 %s22, %s23
      %s270 = smul.u32 2, %s269
      %s271 = sadd.s32 %s22, %s23
      %s272 = smul.u32 2, %s271
      %p273 = scmp.lt.s32.totalorder %s272, 3
      %s274 = scalar_select %p273, %s272, 3
      %s275 = smul.addr %s274, 2
      %s276 = scalar_lea.vmem %s3, %s275
      %s277 = sadd.s32 %s22, %s23
      %s278 = smul.u32 2, %s277
      %p279 = scmp.lt.s32.totalorder %s22, 1
      %s280 = scalar_select %p279, %s22, 1
      %s281 = smul.addr %s280, 2
      %s282 = smul.addr %s281, 8
      %s283 = scalar_lea.vmem %s4, %s282
      %p284 = scmp.lt.s32.totalorder %s22, 1
      %s285 = scalar_select %p284, %s22, 1
      %s286 = smul.addr %s285, 2
      %s287 = smul.addr %s286, 8
      %s288 = scalar_lea.vmem %s5, %s287
      %v289 = vld [vmem:[%s2] sm:$0xff]
      %v290 = vld [vmem:[%s268] sm:$0xff]
      %v292 = vcombine.high %v290, %v290
      %vm293 = vcmask 31744
      %v295 = vsel %vm293, %v289, 0
      %vm297 = vcmask 1043456
      %v298 = vsel %vm297, %v290, 0
      %v300 = vsel %vm297, %v292, 0
      %302 = vmatprep.subr.mxu0 %v300
      %303 = vmatpush1.msra.mxu0 %v298
      %304 = vmatprep.subr.mxu0 0.0
      %305 = vmatpush1.msra.mxu0 0.0
      %306 = vmatprep.subr.mxu0 0.0
      %307 = vmatpush1.msra.mxu0 0.0
      %308 = vmatprep.subr.mxu0 0.0
      %309 = vmatpush1.msra.mxu0 0.0
      %310 = vmatprep.subr.mxu0 0.0
      %311 = vmatpush1.msra.mxu0 0.0
      %312 = vmatprep.subr.mxu0 0.0
      %313 = vmatpush1.msra.mxu0 0.0
      %314 = vmatprep.subr.mxu0 0.0
      %315 = vmatpush1.msra.mxu0 0.0
      %316 = vmatprep.subr.mxu0 0.0
      %317 = vmatpush1.msra.mxu0 0.0
      %318 = vmatprep.subr.mxu0 0.0
      %319 = vmatpush1.msra.mxu0 0.0
      %320 = vmatprep.subr.mxu0 0.0
      %321 = vmatpush1.msra.mxu0 0.0
      %322 = vmatprep.subr.mxu0 0.0
      %323 = vmatpush1.msra.mxu0 0.0
      %324 = vmatprep.subr.mxu0 0.0
      %325 = vmatpush1.msra.mxu0 0.0
      %326 = vmatprep.subr.mxu0 0.0
      %327 = vmatpush1.msra.mxu0 0.0
      %328 = vmatprep.subr.mxu0 0.0
      %329 = vmatpush1.msra.mxu0 0.0
      %330 = vmatprep.subr.mxu0 0.0
      %331 = vmatpush1.msra.mxu0 0.0
      %332 = vmatprep.subr.mxu0 0.0
      %333 = vmatpush1.msra.mxu0 0.0
      %334 = vmatprep.subr.mxu0 0.0
      %335 = vmatpush1.msra.mxu0 0.0
      %336 = vmatprep.subr.mxu0 0.0
      %337 = vmatpush1.msra.mxu0 0.0
      %338 = vmatprep.subr.mxu0 0.0
      %339 = vmatpush1.msra.mxu0 0.0
      %340 = vmatprep.subr.mxu0 0.0
      %341 = vmatpush1.msra.mxu0 0.0
      %342 = vmatprep.subr.mxu0 0.0
      %343 = vmatpush1.msra.mxu0 0.0
      %344 = vmatprep.subr.mxu0 0.0
      %345 = vmatpush1.msra.mxu0 0.0
      %346 = vmatprep.subr.mxu0 0.0
      %347 = vmatpush1.msra.mxu0 0.0
      %348 = vmatprep.subr.mxu0 0.0
      %349 = vmatpush1.msra.mxu0 0.0
      %350 = vmatprep.subr.mxu0 0.0
      %351 = vmatpush1.msra.mxu0 0.0
      %352 = vmatprep.subr.mxu0 0.0
      %353 = vmatpush1.msra.mxu0 0.0
      %354 = vmatprep.subr.mxu0 0.0
      %355 = vmatpush1.msra.mxu0 0.0
      %356 = vmatprep.subr.mxu0 0.0
      %357 = vmatpush1.msra.mxu0 0.0
      %358 = vmatprep.subr.mxu0 0.0
      %359 = vmatpush1.msra.mxu0 0.0
      %360 = vmatprep.subr.mxu0 0.0
      %361 = vmatpush1.msra.mxu0 0.0
      %362 = vmatprep.subr.mxu0 0.0
      %363 = vmatpush1.msra.mxu0 0.0
      %364 = vmatprep.subr.mxu0 0.0
      %365 = vmatpush1.msra.mxu0 0.0
      %366 = vmatprep.mubr.f32.mxu0 0.0
      %367 = vmatmul.mubr.f32.gmra.mrb[0].mxu0 %v295
      %v368 = vpop.f32.mrb[0].mxu0
      %v369 = vadd.f32 0.0, %v368
      %v370 = vpop.f32.mrb[0].mxu0
      %v371 = vadd.f32 0.0, %v370
      %372 = vdwg.mxu0
      %s373 = sld [smem:[#allocation2]]
      %v374 = vstv %s373
      %v375 = vmul.f32 %v374, %v369
      %v376 = vmul.f32 %v374, %v371
      %v377 = vtanh.pop %v375
      %v378 = vtanh.pop %v376
      %v379 = vld [vmem:[%s276] ss:$2 sm:$0x3]
      %v381 = vlaneseq
      %v382 = vshrl.u32 %v381, 7
      %v383 = vsub.s32 0, %v382
      %v384 = vrot.slane %v379, %v383
      %v385 = vlaneseq
      %v386 = vshrl.u32 %v385, 7
      %v387 = vsub.s32 1, %v386
      %v388 = vrot.slane %v379, %v387
      %v391 = vmul.f32 %v377, %v384
      %v392 = vmul.f32 %v378, %v388
      %s393 = scalar_lea.vmem %s276, 1
      %v394 = vld [vmem:[%s393] ss:$2 sm:$0x3]
      %v396 = vlaneseq
      %v397 = vshrl.u32 %v396, 7
      %v398 = vsub.s32 0, %v397
      %v399 = vrot.slane %v394, %v398
      %v400 = vlaneseq
      %v401 = vshrl.u32 %v400, 7
      %v402 = vsub.s32 1, %v401
      %v403 = vrot.slane %v394, %v402
      %v406 = vadd.f32 %v391, %v399
      %v407 = vadd.f32 %v392, %v403
      %v408 = vmul.f32 %v369, %v406
      %v409 = vmul.f32 %v371, %v407
      %p410 = scmp.eq.s32.totalorder %s23, 0
      // Predicated region
      $region37: #{dyt_conv_forward.2} parent=35 // pred_check
        %p411 = pneg %p410
      $region38: #{dyt_conv_forward.2} parent=35 // pred_check_branch
        %413 = sbr.rel (%p411) target = $region40
      $region39: #{dyt_conv_forward.2} parent=35 // pred_region
        %414 = vst [vmem:[%s283] sm:$0xff] 0.0
        %415 = vst [vmem:[%s283 + $0x8] sm:$0xff] 0.0
        %416 = vst [vmem:[%s288] sm:$0xff] 0.0
        %417 = vst [vmem:[%s288 + $0x8] sm:$0xff] 0.0
      $region40: #{dyt_conv_forward.2} parent=35 // pred_fallthru
        _
      %v418 = vld [vmem:[%s283] sm:$0xff]
      %v419 = vld [vmem:[%s283 + $0x8] sm:$0xff]
      %v420 = vadd.f32 %v418, %v408
      %v421 = vadd.f32 %v419, %v409
      %422 = vst [vmem:[%s283] sm:$0xff] %v420
      %423 = vst [vmem:[%s283 + $0x8] sm:$0xff] %v421
      %v424 = vld [vmem:[%s288] sm:$0xff]
      %v425 = vld [vmem:[%s288 + $0x8] sm:$0xff]
      %v426 = vmul.f32 %v408, %v408
      %v427 = vmul.f32 %v409, %v409
      %v428 = vadd.f32 %v424, %v426
      %v429 = vadd.f32 %v425, %v427
      %430 = vst [vmem:[%s288] sm:$0xff] %v428
      %431 = vst [vmem:[%s288 + $0x8] sm:$0xff] %v429
      %p432 = scmp.lt.s32.totalorder %s22, 1
      %s433 = scalar_select %p432, %s22, 1
      %s434 = smul.addr %s433, 2
      %s435 = smul.addr %s434, 8
      %s436 = scalar_lea.vmem %s4, %s435
      %p437 = scmp.lt.s32.totalorder %s22, 1
      %s438 = scalar_select %p437, %s22, 1
      %s439 = smul.addr %s438, 2
      %s440 = smul.addr %s439, 8
      %s441 = scalar_lea.vmem %s5, %s440
      // Predicated region
      $region41: #{dyt_conv_forward.2} parent=35 // pred_check
        %p442 = pneg %p146
      $region42: #{dyt_conv_forward.2} parent=35 // pred_check_branch
        %444 = sbr.rel (%p442) target = $region44
      $region43: #{dyt_conv_forward.2} parent=35 // pred_region
        _
      $region44: #{dyt_conv_forward.2} parent=35 // pred_fallthru
        _
      // Predicated region
      $region45: #{dyt_conv_forward.2} parent=35 // pred_check
        %p445 = pneg %p172
      $region46: #{dyt_conv_forward.2} parent=35 // pred_check_branch
        %447 = sbr.rel (%p445) target = $region48
      $region47: #{dyt_conv_forward.2} parent=35 // pred_region
        _
      $region48: #{dyt_conv_forward.2} parent=35 // pred_fallthru
        _
    $region36: #{dyt_conv_forward.2} parent=5 // pred_fallthru
      _
    %p448 = scmp.le.s32.totalorder 2, %s13
    // Predicated region
    $region49: #{dyt_conv_forward.2} parent=5 // pred_check
      %p449 = pneg %p448
    $region50: #{dyt_conv_forward.2} parent=5 // pred_check_branch
      %451 = sbr.rel (%p449) target = $region52
    $region51: #{dyt_conv_forward.2} parent=5 // pred_region
      %s452 = ssub.s32 %s13, 2
      // Predicated region
      $region53: #{dyt_conv_forward.2} parent=51 // pred_check
        %p453 = pneg %p152
      $region54: #{dyt_conv_forward.2} parent=51 // pred_check_branch
        %455 = sbr.rel (%p453) target = $region56
      $region55: #{dyt_conv_forward.2} parent=51 // pred_region
        %p456 = scmp.lt.s32.totalorder %s24, 1
        %s457 = scalar_select %p456, %s24, 1
        %s458 = smul.addr %s457, 2
        %s459 = smul.addr %s458, 8
        %s460 = scalar_lea.vmem %s4, %s459
      $region56: #{dyt_conv_forward.2} parent=51 // pred_fallthru
        _
      // Predicated region
      $region57: #{dyt_conv_forward.2} parent=51 // pred_check
        %p461 = pneg %p178
      $region58: #{dyt_conv_forward.2} parent=51 // pred_check_branch
        %463 = sbr.rel (%p461) target = $region60
      $region59: #{dyt_conv_forward.2} parent=51 // pred_region
        %p464 = scmp.lt.s32.totalorder %s24, 1
        %s465 = scalar_select %p464, %s24, 1
        %s466 = smul.addr %s465, 2
        %s467 = smul.addr %s466, 8
        %s468 = scalar_lea.vmem %s5, %s467
      $region60: #{dyt_conv_forward.2} parent=51 // pred_fallthru
        _
    $region52: #{dyt_conv_forward.2} parent=5 // pred_fallthru
      _
  $region6: #{dyt_conv_forward.2} parent=0 // loop_footer
    %s17 = sadd.s32 1, %s13
  $region7: #{dyt_conv_forward.2} parent=0 // loop_footer_branch
    %12 = sbr.rel target = $region3
  $region8: #{dyt_conv_forward.2} parent=0 // loop_exit
    _

// kernel: dyt_conv_forward.3
$region0: #{dyt_conv_forward.3}
  #allocation0 [shape = 'u32[]', space=smem, size = 0x4, offset = 0x4, fixed_abs, tag = 'smem constant byte address 0x4 - core index']
  #allocation1 [shape = 'u32[144,128]{1,0:T(1,128)}', space=vmem, size = 0x12000, scoped, tag = 'internal scratch']
  #allocation2 [shape = 'f32[1]{0:T(128)S(6)}', space=smem, size = 0x200, scoped, tag = 'scoped memory for dyt_conv_forward.3']
  %s0 = inlined_call_operand.<no memory space> [shape: f32[1], index: 0, kind: input, shape index: {}]
  %s1 = inlined_call_operand.vmem [shape: f32[4,512], index: 1, kind: input, shape index: {}]
  %s2 = inlined_call_operand.vmem [shape: f32[8,4], index: 2, kind: input, shape index: {}]
  %s3 = inlined_call_operand.vmem [shape: f32[2,512], index: 3, kind: input, shape index: {}]
  %s4 = inlined_call_operand.vmem [shape: f32[8,1], index: 4, kind: input, shape index: {}]
  %s5 = inlined_call_operand.vmem [shape: f32[8,1], index: 5, kind: input, shape index: {}]
  %s6 = inlined_call_operand.vmem [shape: f32[8,512], index: 6, kind: output, shape index: {}]
  %s7 = sld [smem:[#allocation0]]
  $region57: #{dyt_conv_forward.3} parent=0
    _
  %s9 = ssub.s32 1, %s7
  %s10 = scalar_select 0, %s9, %s7
  %11 = sst [smem:[#allocation2]] %s0
  loop: start=0, step=1, limit=4
  $region2: #{dyt_conv_forward.3} parent=0 // loop_pre_header
    _
  $region3: #{dyt_conv_forward.3} parent=0 // loop_header
    %s13 = sphi 0, %s17
    %p14 = scmp.ge.s32.totalorder %s13, 4
    %s21 = sphi 0, %s21
    %s23 = sphi 0, %s21
    %s24 = sphi 0, %s23
    %s38 = sphi 0, %s24
    %s44 = sphi 0, %s46
    %s47 = sphi 0, %s44
    %s48 = sphi 0, %s47
    %s64 = sphi 0, %s48
    %s68 = sphi 0, %s68
    %s70 = sphi 0, %s68
    %s71 = sphi 0, %s70
    %s85 = sphi 0, %s71
    %s91 = sphi 0, %s93
    %s94 = sphi 0, %s91
    %s95 = sphi 0, %s94
    %s111 = sphi 0, %s95
    %s115 = sphi 0, %s115
    %s117 = sphi 0, %s115
    %s118 = sphi 0, %s117
    %s132 = sphi 0, %s118
    %s136 = sphi 0, %s136
    %s138 = sphi 0, %s136
    %s139 = sphi 0, %s138
    %s153 = sphi 0, %s139
    %s159 = sphi 0, %s161
    %s162 = sphi 0, %s159
    %s163 = sphi 0, %s162
    %s179 = sphi 0, %s163
  $region4: #{dyt_conv_forward.3} parent=0 // loop_header_branch
    %16 = sbr.rel (%p14) target = $region8
  $region5: #{dyt_conv_forward.3} parent=0 // loop_body
    %s18 = ssub.s32 %s13, 1
    %s19 = ssub.s32 %s13, 2
    %s20 = sadd.s32 %s13, 1
    %s22 = sadd.s32 %s21, 1
    %p25 = scmp.eq.s32.totalorder %s13, 1
    %p26 = scmp.ne.s32.totalorder %s21, %s23
    %p27 = scmp.eq.s32.totalorder %s13, 0
    %p28 = por %p26, %p27
    %p29 = scmp.ne.s32.totalorder %s21, %s23
    %p30 = scmp.eq.s32.totalorder %s18, 1
    %p31 = por %p29, %p30
    %p32 = scmp.ne.s32.totalorder %s23, %s24
    %p33 = scmp.eq.s32.totalorder %s18, 0
    %p34 = por %p32, %p33
    %p35 = scmp.ne.s32.totalorder %s23, %s24
    %p36 = scmp.eq.s32.totalorder %s19, 1
    %p37 = por %p35, %p36
    %p39 = scmp.ne.s32.totalorder %s24, %s38
    %p40 = scmp.eq.s32.totalorder %s19, 0
    %p41 = por %p39, %p40
    %s42 = ssub.s32 %s13, %s20
    %p43 = scmp.eq.s32.totalorder %s42, 0
    %s45 = sadd.s32 %s44, 1
    %s46 = scalar_select %p43, %s44, %s45
    %p49 = pneg %p43
    %p50 = scmp.eq.s32.totalorder %s13, 1
    %p51 = por %p49, %p50
    %p52 = scmp.ne.s32.totalorder %s44, %s47
    %p53 = scmp.eq.s32.totalorder %s13, 0
    %p54 = por %p52, %p53
    %p55 = scmp.ne.s32.totalorder %s44, %s47
    %p56 = scmp.eq.s32.totalorder %s18, 1
    %p57 = por %p55, %p56
    %p58 = scmp.ne.s32.totalorder %s47, %s48
    %p59 = scmp.eq.s32.totalorder %s18, 0
    %p60 = por %p58, %p59
    %p61 = scmp.ne.s32.totalorder %s47, %s48
    %p62 = scmp.eq.s32.totalorder %s19, 1
    %p63 = por %p61, %p62
    %p65 = scmp.ne.s32.totalorder %s48, %s64
    %p66 = scmp.eq.s32.totalorder %s19, 0
    %p67 = por %p65, %p66
    %s69 = sadd.s32 %s68, 1
    %p72 = scmp.eq.s32.totalorder %s13, 1
    %p73 = scmp.ne.s32.totalorder %s68, %s70
    %p74 = scmp.eq.s32.totalorder %s13, 0
    %p75 = por %p73, %p74
    %p76 = scmp.ne.s32.totalorder %s68, %s70
    %p77 = scmp.eq.s32.totalorder %s18, 1
    %p78 = por %p76, %p77
    %p79 = scmp.ne.s32.totalorder %s70, %s71
    %p80 = scmp.eq.s32.totalorder %s18, 0
    %p81 = por %p79, %p80
    %p82 = scmp.ne.s32.totalorder %s70, %s71
    %p83 = scmp.eq.s32.totalorder %s19, 1
    %p84 = por %p82, %p83
    %p86 = scmp.ne.s32.totalorder %s71, %s85
    %p87 = scmp.eq.s32.totalorder %s19, 0
    %p88 = por %p86, %p87
    %s89 = ssub.s32 %s13, %s20
    %p90 = scmp.eq.s32.totalorder %s89, 0
    %s92 = sadd.s32 %s91, 1
    %s93 = scalar_select %p90, %s91, %s92
    %p96 = pneg %p90
    %p97 = scmp.eq.s32.totalorder %s13, 1
    %p98 = por %p96, %p97
    %p99 = scmp.ne.s32.totalorder %s91, %s94
    %p100 = scmp.eq.s32.totalorder %s13, 0
    %p101 = por %p99, %p100
    %p102 = scmp.ne.s32.totalorder %s91, %s94
    %p103 = scmp.eq.s32.totalorder %s18, 1
    %p104 = por %p102, %p103
    %p105 = scmp.ne.s32.totalorder %s94, %s95
    %p106 = scmp.eq.s32.totalorder %s18, 0
    %p107 = por %p105, %p106
    %p108 = scmp.ne.s32.totalorder %s94, %s95
    %p109 = scmp.eq.s32.totalorder %s19, 1
    %p110 = por %p108, %p109
    %p112 = scmp.ne.s32.totalorder %s95, %s111
    %p113 = scmp.eq.s32.totalorder %s19, 0
    %p114 = por %p112, %p113
    %s116 = sadd.s32 %s115, 1
    %p119 = scmp.eq.s32.totalorder %s13, 1
    %p120 = scmp.ne.s32.totalorder %s115, %s117
    %p121 = scmp.eq.s32.totalorder %s13, 0
    %p122 = por %p120, %p121
    %p123 = scmp.ne.s32.totalorder %s115, %s117
    %p124 = scmp.eq.s32.totalorder %s18, 1
    %p125 = por %p123, %p124
    %p126 = scmp.ne.s32.totalorder %s117, %s118
    %p127 = scmp.eq.s32.totalorder %s18, 0
    %p128 = por %p126, %p127
    %p129 = scmp.ne.s32.totalorder %s117, %s118
    %p130 = scmp.eq.s32.totalorder %s19, 1
    %p131 = por %p129, %p130
    %p133 = scmp.ne.s32.totalorder %s118, %s132
    %p134 = scmp.eq.s32.totalorder %s19, 0
    %p135 = por %p133, %p134
    %s137 = sadd.s32 %s136, 1
    %p140 = scmp.eq.s32.totalorder %s13, 1
    %p141 = scmp.ne.s32.totalorder %s136, %s138
    %p142 = scmp.eq.s32.totalorder %s13, 0
    %p143 = por %p141, %p142
    %p144 = scmp.ne.s32.totalorder %s136, %s138
    %p145 = scmp.eq.s32.totalorder %s18, 1
    %p146 = por %p144, %p145
    %p147 = scmp.ne.s32.totalorder %s138, %s139
    %p148 = scmp.eq.s32.totalorder %s18, 0
    %p149 = por %p147, %p148
    %p150 = scmp.ne.s32.totalorder %s138, %s139
    %p151 = scmp.eq.s32.totalorder %s19, 1
    %p152 = por %p150, %p151
    %p154 = scmp.ne.s32.totalorder %s139, %s153
    %p155 = scmp.eq.s32.totalorder %s19, 0
    %p156 = por %p154, %p155
    %s157 = ssub.s32 %s13, %s20
    %p158 = scmp.eq.s32.totalorder %s157, 0
    %s160 = sadd.s32 %s159, 1
    %s161 = scalar_select %p158, %s159, %s160
    %p164 = pneg %p158
    %p165 = scmp.eq.s32.totalorder %s13, 1
    %p166 = por %p164, %p165
    %p167 = scmp.ne.s32.totalorder %s159, %s162
    %p168 = scmp.eq.s32.totalorder %s13, 0
    %p169 = por %p167, %p168
    %p170 = scmp.ne.s32.totalorder %s159, %s162
    %p171 = scmp.eq.s32.totalorder %s18, 1
    %p172 = por %p170, %p171
    %p173 = scmp.ne.s32.totalorder %s162, %s163
    %p174 = scmp.eq.s32.totalorder %s18, 0
    %p175 = por %p173, %p174
    %p176 = scmp.ne.s32.totalorder %s162, %s163
    %p177 = scmp.eq.s32.totalorder %s19, 1
    %p178 = por %p176, %p177
    %p180 = scmp.ne.s32.totalorder %s163, %s179
    %p181 = scmp.eq.s32.totalorder %s19, 0
    %p182 = por %p180, %p181
    %p183 = scmp.le.s32.totalorder 1, %s13
    %p184 = scmp.lt.s32.totalorder %s13, 3
    %p185 = pnand %p183, %p184
    %p186 = pneg %p185
    // Predicated region
    $region9: #{dyt_conv_forward.3} parent=5 // pred_check
      _
    $region10: #{dyt_conv_forward.3} parent=5 // pred_check_branch
      %188 = sbr.rel (%p185) target = $region12
    $region11: #{dyt_conv_forward.3} parent=5 // pred_region
      %s189 = ssub.s32 %s13, 1
      // Predicated region
      $region13: #{dyt_conv_forward.3} parent=11 // pred_check
        %p190 = pneg %p34
      $region14: #{dyt_conv_forward.3} parent=11 // pred_check_branch
        %192 = sbr.rel (%p190) target = $region16
      $region15: #{dyt_conv_forward.3} parent=11 // pred_region
        _
      $region16: #{dyt_conv_forward.3} parent=11 // pred_fallthru
        _
      // Predicated region
      $region17: #{dyt_conv_forward.3} parent=11 // pred_check
        %p193 = pneg %p81
      $region18: #{dyt_conv_forward.3} parent=11 // pred_check_branch
        %195 = sbr.rel (%p193) target = $region20
      $region19: #{dyt_conv_forward.3} parent=11 // pred_region
        _
      $region20: #{dyt_conv_forward.3} parent=11 // pred_fallthru
        _
      // Predicated region
      $region21: #{dyt_conv_forward.3} parent=11 // pred_check
        %p196 = pneg %p128
      $region22: #{dyt_conv_forward.3} parent=11 // pred_check_branch
        %198 = sbr.rel (%p196) target = $region24
      $region23: #{dyt_conv_forward.3} parent=11 // pred_region
        _
      $region24: #{dyt_conv_forward.3} parent=11 // pred_fallthru
        _
      // Predicated region
      $region25: #{dyt_conv_forward.3} parent=11 // pred_check
        %p199 = pneg %p149
      $region26: #{dyt_conv_forward.3} parent=11 // pred_check_branch
        %201 = sbr.rel (%p199) target = $region28
      $region27: #{dyt_conv_forward.3} parent=11 // pred_region
        _
      $region28: #{dyt_conv_forward.3} parent=11 // pred_fallthru
        _
    $region12: #{dyt_conv_forward.3} parent=5 // pred_fallthru
      _
    %p202 = scmp.lt.s32.totalorder %s13, 2
    // Predicated region
    $region29: #{dyt_conv_forward.3} parent=5 // pred_check
      %p203 = pneg %p202
    $region30: #{dyt_conv_forward.3} parent=5 // pred_check_branch
      %205 = sbr.rel (%p203) target = $region32
    $region31: #{dyt_conv_forward.3} parent=5 // pred_region
      // Predicated region
      $region33: #{dyt_conv_forward.3} parent=31 // pred_check
        %p206 = pneg %p54
      $region34: #{dyt_conv_forward.3} parent=31 // pred_check_branch
        %208 = sbr.rel (%p206) target = $region36
      $region35: #{dyt_conv_forward.3} parent=31 // pred_region
        %s209 = smul.u32 2, %s13
        %p210 = scmp.lt.s32.totalorder %s209, 3
        %s211 = scalar_select %p210, %s209, 3
        %s212 = smul.addr %s211, 4
        %s213 = scalar_lea.vmem %s1, %s212
        %s214 = smul.u32 2, %s13
      $region36: #{dyt_conv_forward.3} parent=31 // pred_fallthru
        _
      // Predicated region
      $region37: #{dyt_conv_forward.3} parent=31 // pred_check
        %p215 = pneg %p101
      $region38: #{dyt_conv_forward.3} parent=31 // pred_check_branch
        %217 = sbr.rel (%p215) target = $region40
      $region39: #{dyt_conv_forward.3} parent=31 // pred_region
        %s218 = smul.u32 2, %s13
        %p219 = scmp.lt.s32.totalorder %s218, 3
        %s220 = scalar_select %p219, %s218, 3
        %s221 = smul.addr %s220, 2
        %s222 = scalar_lea.vmem %s3, %s221
        %s223 = smul.u32 2, %s13
      $region40: #{dyt_conv_forward.3} parent=31 // pred_fallthru
        _
    $region32: #{dyt_conv_forward.3} parent=5 // pred_fallthru
      _
    %p224 = scmp.le.s32.totalorder 1, %s13
    %p225 = scmp.lt.s32.totalorder %s13, 3
    %p226 = pnand %p224, %p225
    %p227 = pneg %p226
    // Predicated region
    $region41: #{dyt_conv_forward.3} parent=5 // pred_check
      _
    $region42: #{dyt_conv_forward.3} parent=5 // pred_check_branch
      %229 = sbr.rel (%p226) target = $region44
    $region43: #{dyt_conv_forward.3} parent=5 // pred_region
      %s230 = ssub.s32 %s13, 1
      %p231 = pneg %p34
      %p232 = pneg %p31
      %s233 = smul.u32 2, %s18
      %p234 = scmp.lt.s32.totalorder %s233, 3
      %s235 = scalar_select %p234, %s233, 3
      %s236 = smul.addr %s235, 4
      %s237 = scalar_lea.vmem %s1, %s236
      %p238 = pneg %p60
      %p239 = pneg %p57
      %p240 = pneg %p81
      %p241 = pneg %p78
      %s242 = smul.u32 2, %s18
      %p243 = scmp.lt.s32.totalorder %s242, 3
      %s244 = scalar_select %p243, %s242, 3
      %s245 = smul.addr %s244, 2
      %s246 = scalar_lea.vmem %s3, %s245
      %p247 = pneg %p107
      %p248 = pneg %p104
      %p249 = pneg %p128
      %p250 = pneg %p125
      %p251 = pneg %p149
      %p252 = pneg %p146
      %p253 = pneg %p175
      %p254 = pneg %p172
      %s255 = smul.u32 2, %s18
      %p256 = scmp.lt.s32.totalorder %s255, 3
      %s257 = scalar_select %p256, %s255, 3
      %s258 = smul.addr %s257, 8
      %s259 = scalar_lea.vmem %s6, %s258
      %s260 = smul.u32 2, %s18
      %p261 = scmp.lt.s32.totalorder %s260, 3
      %s262 = scalar_select %p261, %s260, 3
      %s263 = smul.addr %s262, 4
      %s264 = scalar_lea.vmem %s1, %s263
      %s265 = smul.u32 2, %s18
      %s266 = smul.u32 2, %s18
      %p267 = scmp.lt.s32.totalorder %s266, 3
      %s268 = scalar_select %p267, %s266, 3
      %s269 = smul.addr %s268, 2
      %s270 = scalar_lea.vmem %s3, %s269
      %s271 = smul.u32 2, %s18
      %s272 = smul.u32 2, %s18
      %p273 = scmp.lt.s32.totalorder %s272, 3
      %s274 = scalar_select %p273, %s272, 3
      %s275 = smul.addr %s274, 8
      %s276 = scalar_lea.vmem %s6, %s275
      %s277 = smul.u32 2, %s18
      %v278 = vld [vmem:[%s2] sm:$0xff]
      %v279 = vld [vmem:[%s264] sm:$0xff]
      %v281 = vcombine.high %v279, %v279
      %vm282 = vcmask 31744
      %v284 = vsel %vm282, %v278, 0
      %vm286 = vcmask 1043456
      %v287 = vsel %vm286, %v279, 0
      %v289 = vsel %vm286, %v281, 0
      %291 = vmatprep.subr.mxu0 %v289
      %292 = vmatpush1.msra.mxu0 %v287
      %293 = vmatprep.subr.mxu0 0.0
      %294 = vmatpush1.msra.mxu0 0.0
      %295 = vmatprep.subr.mxu0 0.0
      %296 = vmatpush1.msra.mxu0 0.0
      %297 = vmatprep.subr.mxu0 0.0
      %298 = vmatpush1.msra.mxu0 0.0
      %299 = vmatprep.subr.mxu0 0.0
      %300 = vmatpush1.msra.mxu0 0.0
      %301 = vmatprep.subr.mxu0 0.0
      %302 = vmatpush1.msra.mxu0 0.0
      %303 = vmatprep.subr.mxu0 0.0
      %304 = vmatpush1.msra.mxu0 0.0
      %305 = vmatprep.subr.mxu0 0.0
      %306 = vmatpush1.msra.mxu0 0.0
      %307 = vmatprep.subr.mxu0 0.0
      %308 = vmatpush1.msra.mxu0 0.0
      %309 = vmatprep.subr.mxu0 0.0
      %310 = vmatpush1.msra.mxu0 0.0
      %311 = vmatprep.subr.mxu0 0.0
      %312 = vmatpush1.msra.mxu0 0.0
      %313 = vmatprep.subr.mxu0 0.0
      %314 = vmatpush1.msra.mxu0 0.0
      %315 = vmatprep.subr.mxu0 0.0
      %316 = vmatpush1.msra.mxu0 0.0
      %317 = vmatprep.subr.mxu0 0.0
      %318 = vmatpush1.msra.mxu0 0.0
      %319 = vmatprep.subr.mxu0 0.0
      %320 = vmatpush1.msra.mxu0 0.0
      %321 = vmatprep.subr.mxu0 0.0
      %322 = vmatpush1.msra.mxu0 0.0
      %323 = vmatprep.subr.mxu0 0.0
      %324 = vmatpush1.msra.mxu0 0.0
      %325 = vmatprep.subr.mxu0 0.0
      %326 = vmatpush1.msra.mxu0 0.0
      %327 = vmatprep.subr.mxu0 0.0
      %328 = vmatpush1.msra.mxu0 0.0
      %329 = vmatprep.subr.mxu0 0.0
      %330 = vmatpush1.msra.mxu0 0.0
      %331 = vmatprep.subr.mxu0 0.0
      %332 = vmatpush1.msra.mxu0 0.0
      %333 = vmatprep.subr.mxu0 0.0
      %334 = vmatpush1.msra.mxu0 0.0
      %335 = vmatprep.subr.mxu0 0.0
      %336 = vmatpush1.msra.mxu0 0.0
      %337 = vmatprep.subr.mxu0 0.0
      %338 = vmatpush1.msra.mxu0 0.0
      %339 = vmatprep.subr.mxu0 0.0
      %340 = vmatpush1.msra.mxu0 0.0
      %341 = vmatprep.subr.mxu0 0.0
      %342 = vmatpush1.msra.mxu0 0.0
      %343 = vmatprep.subr.mxu0 0.0
      %344 = vmatpush1.msra.mxu0 0.0
      %345 = vmatprep.subr.mxu0 0.0
      %346 = vmatpush1.msra.mxu0 0.0
      %347 = vmatprep.subr.mxu0 0.0
      %348 = vmatpush1.msra.mxu0 0.0
      %349 = vmatprep.subr.mxu0 0.0
      %350 = vmatpush1.msra.mxu0 0.0
      %351 = vmatprep.subr.mxu0 0.0
      %352 = vmatpush1.msra.mxu0 0.0
      %353 = vmatprep.subr.mxu0 0.0
      %354 = vmatpush1.msra.mxu0 0.0
      %355 = vmatprep.mubr.f32.mxu0 0.0
      %356 = vmatmul.mubr.f32.gmra.mrb[0].mxu0 %v284
      %v357 = vpop.f32.mrb[0].mxu0
      %v358 = vadd.f32 0.0, %v357
      %v359 = vpop.f32.mrb[0].mxu0
      %v360 = vadd.f32 0.0, %v359
      %361 = vdwg.mxu0
      %s362 = sld [smem:[#allocation2]]
      %v363 = vstv %s362
      %v364 = vmul.f32 %v363, %v358
      %v365 = vmul.f32 %v363, %v360
      %v366 = vtanh.pop %v364
      %v367 = vtanh.pop %v365
      %v368 = vld [vmem:[%s270] ss:$2 sm:$0x3]
      %v370 = vlaneseq
      %v371 = vshrl.u32 %v370, 7
      %v372 = vsub.s32 0, %v371
      %v373 = vrot.slane %v368, %v372
      %v374 = vlaneseq
      %v375 = vshrl.u32 %v374, 7
      %v376 = vsub.s32 1, %v375
      %v377 = vrot.slane %v368, %v376
      %v380 = vmul.f32 %v366, %v373
      %v381 = vmul.f32 %v367, %v377
      %s382 = scalar_lea.vmem %s270, 1
      %v383 = vld [vmem:[%s382] ss:$2 sm:$0x3]
      %v385 = vlaneseq
      %v386 = vshrl.u32 %v385, 7
      %v387 = vsub.s32 0, %v386
      %v388 = vrot.slane %v383, %v387
      %v389 = vlaneseq
      %v390 = vshrl.u32 %v389, 7
      %v391 = vsub.s32 1, %v390
      %v392 = vrot.slane %v383, %v391
      %v395 = vadd.f32 %v380, %v388
      %v396 = vadd.f32 %v381, %v392
      %v397 = vmul.f32 %v358, %v395
      %v398 = vmul.f32 %v360, %v396
      %v399 = vld [vmem:[%s4] sm:$0xff]
      %401 = vset.pattern.permute.xlu0 0
      %402 = vperm.xlu0 %401, %v399
      %v403 = vpop.permute.xlu0 %402
      %v405 = vmul.f32 %v397, %v403
      %v406 = vmul.f32 %v398, %v403
      %v407 = vld [vmem:[%s5] sm:$0xff]
      %409 = vset.pattern.permute.xlu0 0
      %410 = vperm.xlu0 %409, %v407
      %v411 = vpop.permute.xlu0 %410
      %v413 = vadd.f32 %v405, %v411
      %v414 = vadd.f32 %v406, %v411
      %v415 = vxor.u32 %v413, 2147483648
      %v416 = vxor.u32 %v414, 2147483648
      %v417 = vmul.f32 %v415, 1.442695
      %v418 = vpow.pop %v417
      %v419 = vmul.f32 %v416, 1.442695
      %v420 = vpow.pop %v419
      %v421 = vadd.f32 %v418, 1.0
      %v422 = vadd.f32 %v420, 1.0
      %v423 = vrcp.pop %v421
      %v424 = vmul.f32 1.0, %v423
      %v425 = vrcp.pop %v422
      %v426 = vmul.f32 1.0, %v425
      %v427 = vmul.f32 %v413, %v424
      %v428 = vmul.f32 %v414, %v426
      %429 = vst [vmem:[%s276] sm:$0xff] %v427
      %430 = vst [vmem:[%s276 + $0x8] sm:$0xff] %v428
      %s431 = smul.u32 2, %s18
      %p432 = scmp.lt.s32.totalorder %s431, 3
      %s433 = scalar_select %p432, %s431, 3
      %s434 = smul.addr %s433, 8
      %s435 = scalar_lea.vmem %s6, %s434
      // Predicated region
      $region45: #{dyt_conv_forward.3} parent=43 // pred_check
        %p436 = pneg %p172
      $region46: #{dyt_conv_forward.3} parent=43 // pred_check_branch
        %438 = sbr.rel (%p436) target = $region48
      $region47: #{dyt_conv_forward.3} parent=43 // pred_region
        %s439 = smul.u32 2, %s18
      $region48: #{dyt_conv_forward.3} parent=43 // pred_fallthru
        _
    $region44: #{dyt_conv_forward.3} parent=5 // pred_fallthru
      _
    %p440 = scmp.le.s32.totalorder 2, %s13
    // Predicated region
    $region49: #{dyt_conv_forward.3} parent=5 // pred_check
      %p441 = pneg %p440
    $region50: #{dyt_conv_forward.3} parent=5 // pred_check_branch
      %443 = sbr.rel (%p441) target = $region52
    $region51: #{dyt_conv_forward.3} parent=5 // pred_region
      %s444 = ssub.s32 %s13, 2
      // Predicated region
      $region53: #{dyt_conv_forward.3} parent=51 // pred_check
        %p445 = pneg %p178
      $region54: #{dyt_conv_forward.3} parent=51 // pred_check_branch
        %447 = sbr.rel (%p445) target = $region56
      $region55: #{dyt_conv_forward.3} parent=51 // pred_region
        %s448 = smul.u32 2, %s19
        %p449 = scmp.lt.s32.totalorder %s448, 3
        %s450 = scalar_select %p449, %s448, 3
        %s451 = smul.addr %s450, 8
        %s452 = scalar_lea.vmem %s6, %s451
      $region56: #{dyt_conv_forward.3} parent=51 // pred_fallthru
        _
    $region52: #{dyt_conv_forward.3} parent=5 // pred_fallthru
      _
  $region6: #{dyt_conv_forward.3} parent=0 // loop_footer
    %s17 = sadd.s32 1, %s13
  $region7: #{dyt_conv_forward.3} parent=0 // loop_footer_branch
    %12 = sbr.rel target = $region3
  $region8: #{dyt_conv_forward.3} parent=0 // loop_exit
    _

</llo_original>
